<compile_context>
chip_gen: v7x
topology: tpu7x:2x2x1
jax: 0.10.0
libtpu: 0.0.40
codegen_flags: <defaults>
</compile_context>

<pallas_src>
import jax
import jax.numpy as jnp
from jax.experimental import pallas as pl
from jax.experimental.pallas import tpu as pltpu

LANE = 128      # vreg lane width (last dim)
SUBLANE = 8     # vreg sublane width (second-to-last dim)


def _round_up(n, m):
    return ((n + m - 1) // m) * m


def decoder_kernel(x_ref, w1_ref, b1_ref, w2_ref, b2_ref, o_ref):
    # x: [TB, E] (native dtype), w1: [E, Hp], b1: [1, Hp] f32,
    # w2: [Hp, Cp], b2: [1, Cp] f32, o: [TB, C] with C <= Cp.
    x = x_ref[...].astype(w1_ref.dtype)            # in-kernel cast (no extra HBM pass)
    h = jnp.dot(x, w1_ref[...], preferred_element_type=jnp.float32)
    h = jnp.maximum(h + b1_ref[...], 0.0)          # bias + ReLU in f32
    out = jnp.dot(h.astype(w2_ref.dtype), w2_ref[...],
                  preferred_element_type=jnp.float32)
    out = out + b2_ref[...]
    C = o_ref.shape[-1]                            # static block width
    o_ref[...] = out[:, :C].astype(o_ref.dtype)    # store only the real C columns


def prepare_decoder_params(w1, b1, w2, b2, compute_dtype=None):
    """Pad/cast the weights ONCE (hoisted out of the per-call path).

    w1: [E, H], b1: [H] or [1, H], w2: [H, C], b2: [C] or [1, C].
    compute_dtype (e.g. jnp.bfloat16) only changes the resident-weight dtype;
    accumulation / bias / ReLU stay f32 inside the kernel.
    """
    E, H = w1.shape
    C = w2.shape[1]
    assert w2.shape[0] == H
    b1 = jnp.asarray(b1).reshape(1, H)
    b2 = jnp.asarray(b2).reshape(1, C)
    if compute_dtype is None:
        compute_dtype = w1.dtype

    H_pad = _round_up(H, LANE)
    C_pad = _round_up(C, LANE)

    # Zero padding keeps numerics identical (padded b1 cols are 0, padded w2
    # rows are 0, padded w2/b2 cols are never stored).
    w1_p = jnp.pad(w1, ((0, 0), (0, H_pad - H))).astype(compute_dtype)
    b1_p = jnp.pad(b1, ((0, 0), (0, H_pad - H))).astype(jnp.float32)
    w2_p = jnp.pad(w2, ((0, H_pad - H), (0, C_pad - C))).astype(compute_dtype)
    b2_p = jnp.pad(b2, ((0, 0), (0, C_pad - C))).astype(jnp.float32)
    return (w1_p, b1_p, w2_p, b2_p, C)


def decoder_forward(x, params, *, tile_b=None, out_dtype=None):
    """x: [B, E]; params from prepare_decoder_params().  Returns [B, C]."""
    w1_p, b1_p, w2_p, b2_p, C = params
    B, E = x.shape
    assert w1_p.shape[0] == E
    H_pad = w1_p.shape[1]
    C_pad = w2_p.shape[1]
    if out_dtype is None:
        out_dtype = x.dtype

    x_item = jnp.dtype(x.dtype).itemsize
    o_item = jnp.dtype(out_dtype).itemsize
    w_item = jnp.dtype(w1_p.dtype).itemsize

    # Tile selection: ~4 grid steps (work for both v7x cores + double
    # buffering; few enough steps that 0.35us/step overhead stays small on
    # v5e/v6e).  Cap the per-tile VMEM footprint (double-buffered x/out blocks
    # + f32 intermediates) to ~8 MiB so we stay well under the scoped default
    # on every chip, including v7x (64 MiB physical).
    if tile_b is None:
        tile_b = pl.cdiv(B, 4)
    row_bytes = 2 * E * x_item + 2 * C * o_item + (H_pad + C_pad) * 4
    vmem_cap_rows = max(SUBLANE, ((8 << 20) // row_bytes) // SUBLANE * SUBLANE)
    tile_b = max(SUBLANE, min(_round_up(tile_b, SUBLANE),
                              _round_up(B, SUBLANE),
                              vmem_cap_rows))
    grid = (pl.cdiv(B, tile_b),)   # ragged last tile handled by Pallas masking

    flops = 2 * B * (E * H_pad + H_pad * C_pad)
    bytes_accessed = (
        B * E * x_item                             # streamed x (native dtype)
        + (E * H_pad + H_pad * C_pad) * w_item     # resident weights (once)
        + (H_pad + C_pad) * 4                      # biases
        + B * C * o_item                           # streamed output, true width
    )

    return pl.pallas_call(
        decoder_kernel,
        out_shape=jax.ShapeDtypeStruct((B, C), out_dtype),
        grid=grid,
        in_specs=[
            pl.BlockSpec((tile_b, E), lambda i: (i, 0)),       # x: streamed
            pl.BlockSpec((E, H_pad), lambda i: (0, 0)),        # w1: resident
            pl.BlockSpec((1, H_pad), lambda i: (0, 0)),        # b1: resident
            pl.BlockSpec((H_pad, C_pad), lambda i: (0, 0)),    # w2: resident
            pl.BlockSpec((1, C_pad), lambda i: (0, 0)),        # b2: resident
        ],
        out_specs=pl.BlockSpec((tile_b, C), lambda i: (i, 0)),
        compiler_params=pltpu.CompilerParams(
            dimension_semantics=("parallel",),   # megacore sharding on v7x
        ),
        cost_estimate=pl.CostEstimate(
            flops=flops, transcendentals=0, bytes_accessed=bytes_accessed),
    )(x, w1_p, b1_p, w2_p, b2_p)


def init_decoder_params(key, encoding_shape, class_count, dtype=jnp.float32):
    """Deterministic synthetic init mimicking PyTorch Linear default
    (uniform(-1/sqrt(fan_in), 1/sqrt(fan_in)))."""
    hidden = 4 * class_count
    k1, k2, k3, k4 = jax.random.split(key, 4)

    bound1 = 1.0 / jnp.sqrt(jnp.array(encoding_shape, dtype))
    w1 = jax.random.uniform(k1, (encoding_shape, hidden), dtype, -bound1, bound1)
    b1 = jax.random.uniform(k2, (1, hidden), dtype, -bound1, bound1)

    bound2 = 1.0 / jnp.sqrt(jnp.array(hidden, dtype))
    w2 = jax.random.uniform(k3, (hidden, class_count), dtype, -bound2, bound2)
    b2 = jax.random.uniform(k4, (1, class_count), dtype, -bound2, bound2)
    return w1, b1, w2, b2


def reference_forward(x, w1, b1, w2, b2):
    h = jnp.maximum(x @ w1 + b1, 0.0)
    return h @ w2 + b2


if __name__ == "__main__":
    # Small shapes consistent with the module: x is [batch, encoding_shape].
    batch = 8
    encoding_shape = 32
    class_count = 16  # hidden = 4 * class_count = 64

    key = jax.random.PRNGKey(0)
    kx, kp = jax.random.split(key)
    x = jax.random.normal(kx, (batch, encoding_shape), jnp.float32)
    w1, b1, w2, b2 = init_decoder_params(kp, encoding_shape, class_count)

    # Exact f32 path (matches PyTorch numerics).  Weights prepared once.
    params_f32 = prepare_decoder_params(w1, b1, w2, b2)
    out = decoder_forward(x, params_f32)
    out = jax.block_until_ready(out)
    ref = reference_forward(x, w1, b1, w2, b2)
    assert out.shape == (batch, class_count)
    assert jnp.allclose(out, ref, atol=1e-5, rtol=1e-5), "f32 mismatch vs reference"

    # Streaming multi-tile path (ragged last block) + bf16 resident weights.
    big_batch = 2049  # deliberately not a tile multiple -> exercises masked writeback
    xb = jax.random.normal(jax.random.PRNGKey(1), (big_batch, encoding_shape),
                           jnp.float32)
    params_bf16 = prepare_decoder_params(w1, b1, w2, b2, compute_dtype=jnp.bfloat16)
    outb = decoder_forward(xb, params_bf16)
    outb = jax.block_until_ready(outb)
    refb = reference_forward(xb, w1, b1, w2, b2)
    assert outb.shape == (big_batch, class_count)
    assert jnp.allclose(outb, refb, atol=5e-2, rtol=5e-2), "bf16 mismatch vs reference"

    print("KERNEL_OK")
</pallas_src>

<mosaic_0001>
module attributes {stable_mosaic.version = 11 : i64} {
  func.func @decoder_kernel(%arg0: i32, %arg1: memref<8x32xf32, #tpu.memory_space<vmem>>, %arg2: memref<32x128xf32, #tpu.memory_space<vmem>>, %arg3: memref<1x128xf32, #tpu.memory_space<vmem>>, %arg4: memref<128x128xf32, #tpu.memory_space<vmem>>, %arg5: memref<1x128xf32, #tpu.memory_space<vmem>>, %arg6: memref<8x16xf32, #tpu.memory_space<vmem>>) attributes {dimension_semantics = [#tpu.dimension_semantics<parallel>], iteration_bounds = array<i64: 1>, scalar_prefetch = 0 : i64, scratch_operands = 0 : i64, tpu.core_type = #tpu.core_type<tc>, window_params = [{transform_indices = @transform_0, window_bounds = array<i64: 8, 32>}, {pipeline_mode = #tpu.pipeline_mode<synchronous>, transform_indices = @transform_1, window_bounds = array<i64: 32, 128>}, {pipeline_mode = #tpu.pipeline_mode<synchronous>, transform_indices = @transform_2, window_bounds = array<i64: 1, 128>}, {pipeline_mode = #tpu.pipeline_mode<synchronous>, transform_indices = @transform_3, window_bounds = array<i64: 128, 128>}, {pipeline_mode = #tpu.pipeline_mode<synchronous>, transform_indices = @transform_4, window_bounds = array<i64: 1, 128>}, {transform_indices = @transform_5, window_bounds = array<i64: 8, 16>}]} {
    %c0 = arith.constant 0 : index
    %c0_0 = arith.constant 0 : index
    %0 = vector.load %arg1[%c0, %c0_0] : memref<8x32xf32, #tpu.memory_space<vmem>>, vector<8x32xf32>
    %c0_1 = arith.constant 0 : index
    %c0_2 = arith.constant 0 : index
    %1 = vector.load %arg2[%c0_1, %c0_2] : memref<32x128xf32, #tpu.memory_space<vmem>>, vector<32x128xf32>
    %cst = arith.constant dense<0.000000e+00> : vector<8x128xf32>
    %2 = tpu.matmul %0, %1, %cst {dimension_numbers = #tpu.dot_dimension_numbers<[1], [0], [0], [1], [0, 0, 1, 1], [], []>} : vector<8x32xf32>, vector<32x128xf32>, vector<8x128xf32> -> vector<8x128xf32>
    %c0_3 = arith.constant 0 : index
    %c0_4 = arith.constant 0 : index
    %3 = vector.load %arg3[%c0_3, %c0_4] : memref<1x128xf32, #tpu.memory_space<vmem>>, vector<1x128xf32>
    %4 = vector.broadcast %3 : vector<1x128xf32> to vector<8x128xf32>
    %5 = arith.addf %2, %4 : vector<8x128xf32>
    %cst_5 = arith.constant 0.000000e+00 : f32
    %6 = vector.broadcast %cst_5 : f32 to vector<8x128xf32>
    %7 = arith.maximumf %5, %6 : vector<8x128xf32>
    %c0_6 = arith.constant 0 : index
    %c0_7 = arith.constant 0 : index
    %8 = vector.load %arg4[%c0_6, %c0_7] : memref<128x128xf32, #tpu.memory_space<vmem>>, vector<128x128xf32>
    %cst_8 = arith.constant dense<0.000000e+00> : vector<8x128xf32>
    %9 = tpu.matmul %7, %8, %cst_8 {dimension_numbers = #tpu.dot_dimension_numbers<[1], [0], [0], [1], [0, 0, 1, 1], [], []>} : vector<8x128xf32>, vector<128x128xf32>, vector<8x128xf32> -> vector<8x128xf32>
    %c0_9 = arith.constant 0 : index
    %c0_10 = arith.constant 0 : index
    %10 = vector.load %arg5[%c0_9, %c0_10] : memref<1x128xf32, #tpu.memory_space<vmem>>, vector<1x128xf32>
    %11 = vector.broadcast %10 : vector<1x128xf32> to vector<8x128xf32>
    %12 = arith.addf %9, %11 : vector<8x128xf32>
    %13 = vector.extract_strided_slice %12 {offsets = [0, 0], sizes = [8, 16], strides = [1, 1]} : vector<8x128xf32> to vector<8x16xf32>
    %c0_11 = arith.constant 0 : index
    %c0_12 = arith.constant 0 : index
    %14 = vector.load %arg6[%c0_11, %c0_12] : memref<8x16xf32, #tpu.memory_space<vmem>>, vector<8x16xf32>
    tpu.vector_store %arg6[%c0_11, %c0_12], %13 {strides = array<i32>} : memref<8x16xf32, #tpu.memory_space<vmem>>, vector<8x16xf32>,
    return
  }
  func.func @transform_0(%arg0: i32) -> (i32, i32) {
    %c0_i32 = arith.constant 0 : i32
    %c0_i32_0 = arith.constant 0 : i32
    return %arg0, %c0_i32 : i32, i32
  }
  func.func @transform_1(%arg0: i32) -> (i32, i32) {
    %c0_i32 = arith.constant 0 : i32
    %c0_i32_0 = arith.constant 0 : i32
    %c0_i32_1 = arith.constant 0 : i32
    return %c0_i32, %c0_i32_0 : i32, i32
  }
  func.func @transform_2(%arg0: i32) -> (i32, i32) {
    %c0_i32 = arith.constant 0 : i32
    %c0_i32_0 = arith.constant 0 : i32
    %c0_i32_1 = arith.constant 0 : i32
    return %c0_i32, %c0_i32_0 : i32, i32
  }
  func.func @transform_3(%arg0: i32) -> (i32, i32) {
    %c0_i32 = arith.constant 0 : i32
    %c0_i32_0 = arith.constant 0 : i32
    %c0_i32_1 = arith.constant 0 : i32
    return %c0_i32, %c0_i32_0 : i32, i32
  }
  func.func @transform_4(%arg0: i32) -> (i32, i32) {
    %c0_i32 = arith.constant 0 : i32
    %c0_i32_0 = arith.constant 0 : i32
    %c0_i32_1 = arith.constant 0 : i32
    return %c0_i32, %c0_i32_0 : i32, i32
  }
  func.func @transform_5(%arg0: i32) -> (i32, i32) {
    %c0_i32 = arith.constant 0 : i32
    %c0_i32_0 = arith.constant 0 : i32
    return %arg0, %c0_i32 : i32, i32
  }
}

</mosaic_0001>

<llo_original>
// kernel: tpu_custom_call.1
$region0: #{tpu_custom_call.1}
  #allocation0 [shape = 'u32[]', space=smem, size = 0x4, offset = 0x4, fixed_abs, tag = 'smem constant byte address 0x4 - core index']
  #allocation1 [shape = 'u32[144,128]{1,0:T(1,128)}', space=vmem, size = 0x12000, scoped, tag = 'internal scratch']
  %s0 = inlined_call_operand.hbm [shape: f32[8,32], index: 0, kind: input, shape index: {}]
  %s1 = inlined_call_operand.hbm [shape: f32[32,128], index: 1, kind: input, shape index: {}]
  %s2 = inlined_call_operand.vmem [shape: f32[1,128], index: 2, kind: input, shape index: {}]
  %s3 = inlined_call_operand.hbm [shape: f32[128,128], index: 3, kind: input, shape index: {}]
  %s4 = inlined_call_operand.vmem [shape: f32[1,128], index: 4, kind: input, shape index: {}]
  %s5 = inlined_call_operand.hbm [shape: f32[8,16], index: 5, kind: output, shape index: {}]
  %s6 = sld [smem:[#allocation0]]
  $region42: #{tpu_custom_call.1} parent=0
    _
  %s8 = ssub.s32 1, %s6
  %s9 = scalar_select 0, %s8, %s6
  $region1: #{tpu_custom_call.1} parent=0
    #allocation2 [shape = 'u8[4096]{0}', space=vmem, size = 0x1000, scoped, tag = 'input window, operand 0, single buffered']
    #allocation3 [shape = 's32[1]{0}', space=sflag, size = 0x4, scoped, tag = 'scoped memory for tpu_custom_call.1']
    #allocation4 [shape = 's32[1]{0}', space=sflag, size = 0x4, scoped, tag = 'scoped memory for tpu_custom_call.1']
    #allocation5 [shape = 'u8[16384]{0}', space=vmem, size = 0x4000, scoped, tag = 'input window, operand 1, single buffered']
    #allocation6 [shape = 's32[1]{0}', space=sflag, size = 0x4, scoped, tag = 'scoped memory for tpu_custom_call.1']
    #allocation7 [shape = 'u8[65536]{0}', space=vmem, size = 0x10000, scoped, tag = 'input window, operand 3, single buffered']
    #allocation8 [shape = 'u8[4096]{0}', space=vmem, size = 0x1000, scoped, tag = 'output window, operand 0, single buffered']
    %10 = vsyncpa [#allocation3], 0
    %11 = vsyncpa [#allocation6], 0
    %12 = vsyncpa [#allocation4], 0
    // Predicated region
    $region2: #{tpu_custom_call.1} parent=1 // pred_check
      _
    $region3: #{tpu_custom_call.1} parent=1 // pred_check_branch
      %14 = sbr.rel (0) target = $region5
    $region4: #{tpu_custom_call.1} parent=1 // pred_region
      %s16 = ssub.s32 128, 128
      %17 = vsyncadd [#allocation3], %s16
      %s19 = sshll.u32 [#allocation2], 4
      %s20 = int_to_ptr.vmem [resolvable:$true] %s19
      %22 = dma.hbm_to_vmem [thread:$0]  %s0, 128, %s20, [#allocation3]
    $region5: #{tpu_custom_call.1} parent=1 // pred_fallthru
      _
    // Predicated region
    $region6: #{tpu_custom_call.1} parent=1 // pred_check
      _
    $region7: #{tpu_custom_call.1} parent=1 // pred_check_branch
      %24 = sbr.rel (0) target = $region9
    $region8: #{tpu_custom_call.1} parent=1 // pred_region
      %s26 = ssub.s32 512, 512
      %27 = vsyncadd [#allocation6], %s26
      %s28 = sshll.u32 [#allocation5], 4
      %s29 = int_to_ptr.vmem [resolvable:$true] %s28
      %34 = dma.hbm_to_vmem [thread:$0]  %s1, 512, %s29, [#allocation6], 128, 128, 8
    $region9: #{tpu_custom_call.1} parent=1 // pred_fallthru
      _
    // Predicated region
    $region10: #{tpu_custom_call.1} parent=1 // pred_check
      _
    $region11: #{tpu_custom_call.1} parent=1 // pred_check_branch
      %36 = sbr.rel (0) target = $region13
    $region12: #{tpu_custom_call.1} parent=1 // pred_region
      _
    $region13: #{tpu_custom_call.1} parent=1 // pred_fallthru
      _
    // Predicated region
    $region14: #{tpu_custom_call.1} parent=1 // pred_check
      _
    $region15: #{tpu_custom_call.1} parent=1 // pred_check_branch
      %38 = sbr.rel (0) target = $region17
    $region16: #{tpu_custom_call.1} parent=1 // pred_region
      %s40 = ssub.s32 2048, 2048
      %41 = vsyncadd [#allocation6], %s40
      %s42 = sshll.u32 [#allocation7], 4
      %s43 = int_to_ptr.vmem [resolvable:$true] %s42
      %48 = dma.hbm_to_vmem [thread:$0]  %s3, 2048, %s43, [#allocation6], 128, 128, 8
    $region17: #{tpu_custom_call.1} parent=1 // pred_fallthru
      _
    // Predicated region
    $region18: #{tpu_custom_call.1} parent=1 // pred_check
      _
    $region19: #{tpu_custom_call.1} parent=1 // pred_check_branch
      %50 = sbr.rel (0) target = $region21
    $region20: #{tpu_custom_call.1} parent=1 // pred_region
      _
    $region21: #{tpu_custom_call.1} parent=1 // pred_fallthru
      _
    // Predicated region
    $region22: #{tpu_custom_call.1} parent=1 // pred_check
      _
    $region23: #{tpu_custom_call.1} parent=1 // pred_check_branch
      %52 = sbr.rel (0) target = $region25
    $region24: #{tpu_custom_call.1} parent=1 // pred_region
      %53 = dma.done [#allocation3], 128
    $region25: #{tpu_custom_call.1} parent=1 // pred_fallthru
      _
    // Predicated region
    $region26: #{tpu_custom_call.1} parent=1 // pred_check
      _
    $region27: #{tpu_custom_call.1} parent=1 // pred_check_branch
      %55 = sbr.rel (0) target = $region29
    $region28: #{tpu_custom_call.1} parent=1 // pred_region
      %56 = dma.done [#allocation6], 512
    $region29: #{tpu_custom_call.1} parent=1 // pred_fallthru
      _
    // Predicated region
    $region30: #{tpu_custom_call.1} parent=1 // pred_check
      _
    $region31: #{tpu_custom_call.1} parent=1 // pred_check_branch
      %58 = sbr.rel (0) target = $region33
    $region32: #{tpu_custom_call.1} parent=1 // pred_region
      %59 = dma.done [#allocation6], 2048
    $region33: #{tpu_custom_call.1} parent=1 // pred_fallthru
      _
    %v60 = vld [vmem:[#allocation2] sm:$0xff]
    %v61 = vld [vmem:[#allocation5] sm:$0xff]
    %v62 = vld [vmem:[#allocation5 + $0x8] sm:$0xff]
    %v63 = vld [vmem:[#allocation5 + $0x10] sm:$0xff]
    %v64 = vld [vmem:[#allocation5 + $0x18] sm:$0xff]
    %v65 = vld [vmem:[%s2] sm:$0x1]
    %v67 = vlaneseq
    %v68 = vshrl.u32 %v67, 7
    %v69 = vsub.s32 0, %v68
    %v70 = vrot.slane %v65, %v69
    %vm72 = vcmask 261120
    %v74 = vsel %vm72, %v60, 0
    %76 = vmatprep.subr.mxu0 0.0
    %77 = vmatpush1.msra.mxu0 %v61
    %78 = vmatprep.subr.mxu0 0.0
    %79 = vmatpush1.msra.mxu0 %v62
    %80 = vmatprep.subr.mxu0 0.0
    %81 = vmatpush1.msra.mxu0 %v63
    %82 = vmatprep.subr.mxu0 0.0
    %83 = vmatpush1.msra.mxu0 %v64
    %84 = vmatprep.subr.mxu0 0.0
    %85 = vmatpush1.msra.mxu0 0.0
    %86 = vmatprep.subr.mxu0 0.0
    %87 = vmatpush1.msra.mxu0 0.0
    %88 = vmatprep.subr.mxu0 0.0
    %89 = vmatpush1.msra.mxu0 0.0
    %90 = vmatprep.subr.mxu0 0.0
    %91 = vmatpush1.msra.mxu0 0.0
    %92 = vmatprep.subr.mxu0 0.0
    %93 = vmatpush1.msra.mxu0 0.0
    %94 = vmatprep.subr.mxu0 0.0
    %95 = vmatpush1.msra.mxu0 0.0
    %96 = vmatprep.subr.mxu0 0.0
    %97 = vmatpush1.msra.mxu0 0.0
    %98 = vmatprep.subr.mxu0 0.0
    %99 = vmatpush1.msra.mxu0 0.0
    %100 = vmatprep.subr.mxu0 0.0
    %101 = vmatpush1.msra.mxu0 0.0
    %102 = vmatprep.subr.mxu0 0.0
    %103 = vmatpush1.msra.mxu0 0.0
    %104 = vmatprep.subr.mxu0 0.0
    %105 = vmatpush1.msra.mxu0 0.0
    %106 = vmatprep.subr.mxu0 0.0
    %107 = vmatpush1.msra.mxu0 0.0
    %108 = vmatprep.subr.mxu0 0.0
    %109 = vmatpush1.msra.mxu0 0.0
    %110 = vmatprep.subr.mxu0 0.0
    %111 = vmatpush1.msra.mxu0 0.0
    %112 = vmatprep.subr.mxu0 0.0
    %113 = vmatpush1.msra.mxu0 0.0
    %114 = vmatprep.subr.mxu0 0.0
    %115 = vmatpush1.msra.mxu0 0.0
    %116 = vmatprep.subr.mxu0 0.0
    %117 = vmatpush1.msra.mxu0 0.0
    %118 = vmatprep.subr.mxu0 0.0
    %119 = vmatpush1.msra.mxu0 0.0
    %120 = vmatprep.subr.mxu0 0.0
    %121 = vmatpush1.msra.mxu0 0.0
    %122 = vmatprep.subr.mxu0 0.0
    %123 = vmatpush1.msra.mxu0 0.0
    %124 = vmatprep.subr.mxu0 0.0
    %125 = vmatpush1.msra.mxu0 0.0
    %126 = vmatprep.subr.mxu0 0.0
    %127 = vmatpush1.msra.mxu0 0.0
    %128 = vmatprep.subr.mxu0 0.0
    %129 = vmatpush1.msra.mxu0 0.0
    %130 = vmatprep.subr.mxu0 0.0
    %131 = vmatpush1.msra.mxu0 0.0
    %132 = vmatprep.subr.mxu0 0.0
    %133 = vmatpush1.msra.mxu0 0.0
    %134 = vmatprep.subr.mxu0 0.0
    %135 = vmatpush1.msra.mxu0 0.0
    %136 = vmatprep.subr.mxu0 0.0
    %137 = vmatpush1.msra.mxu0 0.0
    %138 = vmatprep.subr.mxu0 0.0
    %139 = vmatpush1.msra.mxu0 0.0
    %140 = vmatprep.mubr.f32.mxu0 0.0
    %141 = vmatmul.mubr.f32.gmra.mrb[0].mxu0 %v74
    %v142 = vpop.f32.mrb[0].mxu0
    %v143 = vadd.f32 %v70, %v142
    %v144 = vpop.f32.mrb[0].mxu0
    %145 = vdwg.mxu0
    %v146 = vmax.f32 %v143, 0.0
    %v147 = vld [vmem:[#allocation7] sm:$0xff]
    %v148 = vld [vmem:[#allocation7 + $0x8] sm:$0xff]
    %v149 = vld [vmem:[#allocation7 + $0x10] sm:$0xff]
    %v150 = vld [vmem:[#allocation7 + $0x18] sm:$0xff]
    %v151 = vld [vmem:[#allocation7 + $0x20] sm:$0xff]
    %v152 = vld [vmem:[#allocation7 + $0x28] sm:$0xff]
    %v153 = vld [vmem:[#allocation7 + $0x30] sm:$0xff]
    %v154 = vld [vmem:[#allocation7 + $0x38] sm:$0xff]
    %v155 = vld [vmem:[#allocation7 + $0x40] sm:$0xff]
    %v156 = vld [vmem:[#allocation7 + $0x48] sm:$0xff]
    %v157 = vld [vmem:[#allocation7 + $0x50] sm:$0xff]
    %v158 = vld [vmem:[#allocation7 + $0x58] sm:$0xff]
    %v159 = vld [vmem:[#allocation7 + $0x60] sm:$0xff]
    %v160 = vld [vmem:[#allocation7 + $0x68] sm:$0xff]
    %v161 = vld [vmem:[#allocation7 + $0x70] sm:$0xff]
    %v162 = vld [vmem:[#allocation7 + $0x78] sm:$0xff]
    %v163 = vld [vmem:[%s4] sm:$0x1]
    %v165 = vlaneseq
    %v166 = vshrl.u32 %v165, 7
    %v167 = vsub.s32 0, %v166
    %v168 = vrot.slane %v163, %v167
    %170 = vmatprep.subr.mxu0 0.0
    %171 = vmatpush1.msra.mxu0 %v147
    %172 = vmatprep.subr.mxu0 0.0
    %173 = vmatpush1.msra.mxu0 %v148
    %174 = vmatprep.subr.mxu0 0.0
    %175 = vmatpush1.msra.mxu0 %v149
    %176 = vmatprep.subr.mxu0 0.0
    %177 = vmatpush1.msra.mxu0 %v150
    %178 = vmatprep.subr.mxu0 0.0
    %179 = vmatpush1.msra.mxu0 %v151
    %180 = vmatprep.subr.mxu0 0.0
    %181 = vmatpush1.msra.mxu0 %v152
    %182 = vmatprep.subr.mxu0 0.0
    %183 = vmatpush1.msra.mxu0 %v153
    %184 = vmatprep.subr.mxu0 0.0
    %185 = vmatpush1.msra.mxu0 %v154
    %186 = vmatprep.subr.mxu0 0.0
    %187 = vmatpush1.msra.mxu0 %v155
    %188 = vmatprep.subr.mxu0 0.0
    %189 = vmatpush1.msra.mxu0 %v156
    %190 = vmatprep.subr.mxu0 0.0
    %191 = vmatpush1.msra.mxu0 %v157
    %192 = vmatprep.subr.mxu0 0.0
    %193 = vmatpush1.msra.mxu0 %v158
    %194 = vmatprep.subr.mxu0 0.0
    %195 = vmatpush1.msra.mxu0 %v159
    %196 = vmatprep.subr.mxu0 0.0
    %197 = vmatpush1.msra.mxu0 %v160
    %198 = vmatprep.subr.mxu0 0.0
    %199 = vmatpush1.msra.mxu0 %v161
    %200 = vmatprep.subr.mxu0 0.0
    %201 = vmatpush1.msra.mxu0 %v162
    %202 = vmatprep.subr.mxu0 0.0
    %203 = vmatpush1.msra.mxu0 0.0
    %204 = vmatprep.subr.mxu0 0.0
    %205 = vmatpush1.msra.mxu0 0.0
    %206 = vmatprep.subr.mxu0 0.0
    %207 = vmatpush1.msra.mxu0 0.0
    %208 = vmatprep.subr.mxu0 0.0
    %209 = vmatpush1.msra.mxu0 0.0
    %210 = vmatprep.subr.mxu0 0.0
    %211 = vmatpush1.msra.mxu0 0.0
    %212 = vmatprep.subr.mxu0 0.0
    %213 = vmatpush1.msra.mxu0 0.0
    %214 = vmatprep.subr.mxu0 0.0
    %215 = vmatpush1.msra.mxu0 0.0
    %216 = vmatprep.subr.mxu0 0.0
    %217 = vmatpush1.msra.mxu0 0.0
    %218 = vmatprep.subr.mxu0 0.0
    %219 = vmatpush1.msra.mxu0 0.0
    %220 = vmatprep.subr.mxu0 0.0
    %221 = vmatpush1.msra.mxu0 0.0
    %222 = vmatprep.subr.mxu0 0.0
    %223 = vmatpush1.msra.mxu0 0.0
    %224 = vmatprep.subr.mxu0 0.0
    %225 = vmatpush1.msra.mxu0 0.0
    %226 = vmatprep.subr.mxu0 0.0
    %227 = vmatpush1.msra.mxu0 0.0
    %228 = vmatprep.subr.mxu0 0.0
    %229 = vmatpush1.msra.mxu0 0.0
    %230 = vmatprep.subr.mxu0 0.0
    %231 = vmatpush1.msra.mxu0 0.0
    %232 = vmatprep.subr.mxu0 0.0
    %233 = vmatpush1.msra.mxu0 0.0
    %234 = vmatprep.mubr.f32.mxu0 0.0
    %235 = vmatmul.mubr.f32.gmra.mrb[0].mxu0 %v146
    %v236 = vpop.f32.mrb[0].mxu0
    %v237 = vadd.f32 %v168, %v236
    %v238 = vpop.f32.mrb[0].mxu0
    %239 = vdwg.mxu0
    %vm240 = vcmask 130048
    %241 = vst.msk [vmem:[#allocation8] sm:$0xff] %vm240, %v237
    // Predicated region
    $region34: #{tpu_custom_call.1} parent=1 // pred_check
      _
    $region35: #{tpu_custom_call.1} parent=1 // pred_check_branch
      %243 = sbr.rel (0) target = $region37
    $region36: #{tpu_custom_call.1} parent=1 // pred_region
      %s245 = ssub.s32 128, 128
      %246 = vsyncadd [#allocation4], %s245
      %s248 = sshll.u32 [#allocation8], 4
      %s249 = int_to_ptr.vmem [resolvable:$true] %s248
      %251 = dma.vmem_to_hbm [thread:$0]  %s249, 128, %s5, [#allocation4]
    $region37: #{tpu_custom_call.1} parent=1 // pred_fallthru
      _
    // Predicated region
    $region38: #{tpu_custom_call.1} parent=1 // pred_check
      _
    $region39: #{tpu_custom_call.1} parent=1 // pred_check_branch
      %253 = sbr.rel (0) target = $region41
    $region40: #{tpu_custom_call.1} parent=1 // pred_region
      %254 = dma.done [#allocation4], 128
    $region41: #{tpu_custom_call.1} parent=1 // pred_fallthru
      _
    %255 = vsyncpa [#allocation3], 1
    %256 = vsyncpa [#allocation6], 1
    %257 = vsyncpa [#allocation4], 1

</llo_original>
